<compile_context>
chip_gen: v5e
topology: v5e:2x2
jax: 0.10.0
libtpu: 0.0.40
codegen_flags: <defaults>
</compile_context>

<pallas_src>
import functools
import math

import jax
import jax.numpy as jnp
import numpy as np
from jax.experimental import pallas as pl
from jax.experimental.pallas import tpu as pltpu

# ---------------- config (small but lane-aligned synthetic shapes) ----------
BATCH = 2
SEQ = 16
HIDDEN = 256
NUM_HEADS = 2
NUM_KV_HEADS = 2          # must equal NUM_HEADS: the module's memory-update
                          # broadcast (M + sigma(K)^T V) requires it.
HEAD_DIM = HIDDEN // NUM_HEADS     # 128 -> native lane width
ROPE_THETA = 10000.0

assert NUM_KV_HEADS == NUM_HEADS


def _pick_tile(dim, target):
    """Largest multiple-of-8 divisor of `dim` that is <= target (or dim)."""
    if dim <= target:
        return dim
    for t in range(target, 7, -1):
        if dim % t == 0 and t % 8 == 0:
            return t
    # TODO(synk): pad + mask ragged tails instead of falling back to the full
    # dimension (VMEM hazard for non-divisible production sequence lengths).
    return dim


def _elu_p1(x):
    # elu(x) + 1; exp(min(x, 0)) keeps the untaken branch finite.
    return jnp.where(x > 0, x, jnp.exp(jnp.minimum(x, 0.0)) - 1.0) + 1.0


# ---------------- tiled projection matmul (q/k/v fused) ----------------
def _matmul_bias_kernel(x_ref, w_ref, b_ref, o_ref, acc_ref):
    @pl.when(pl.program_id(2) == 0)
    def _init():
        acc_ref[...] = jnp.zeros(acc_ref.shape, jnp.float32)

    acc_ref[...] += jnp.dot(x_ref[...], w_ref[...],
                            preferred_element_type=jnp.float32)

    @pl.when(pl.program_id(2) == pl.num_programs(2) - 1)
    def _finalize():
        o_ref[...] = (acc_ref[...] + b_ref[...]).astype(o_ref.dtype)


def pallas_linear(x, w, b, *, tm=256, tn=256, tk=256):
    """y = x @ w + b, (M, N, K)-tiled grid with a float32 VMEM accumulator."""
    m, k = x.shape
    _, n = w.shape
    tm, tn, tk = _pick_tile(m, tm), _pick_tile(n, tn), _pick_tile(k, tk)
    cost = pl.CostEstimate(flops=2 * m * n * k, transcendentals=0,
                           bytes_accessed=4 * (m * k + k * n + m * n + n))
    return pl.pallas_call(
        _matmul_bias_kernel,
        out_shape=jax.ShapeDtypeStruct((m, n), jnp.float32),
        grid=(m // tm, n // tn, k // tk),
        in_specs=[
            pl.BlockSpec((tm, tk), lambda i, j, kk: (i, kk)),
            pl.BlockSpec((tk, tn), lambda i, j, kk: (kk, j)),
            pl.BlockSpec((1, tn), lambda i, j, kk: (0, j)),
        ],
        out_specs=pl.BlockSpec((tm, tn), lambda i, j, kk: (i, j)),
        scratch_shapes=[pltpu.VMEM((tm, tn), jnp.float32)],
        compiler_params=pltpu.CompilerParams(
            dimension_semantics=("parallel", "parallel", "arbitrary")),
        cost_estimate=cost,
    )(x, w, b.reshape(1, n))


# ---------------- RoPE + relayout + memory-update pre-pass ----------------
def _rope_memory_kernel(q_ref, k_ref, v_ref, cos_ref, sin_ref,
                        m_old_ref, z_old_ref,
                        qo_ref, ko_ref, vo_ref, newm_ref, newz_ref, *, half):
    j = pl.program_id(2)
    cos = cos_ref[0]                      # (ts, D)
    sin = sin_ref[0]                      # pre-signed sin (see wrapper)
    q = q_ref[0]                          # (ts, D) f32
    k = k_ref[0]
    v = v_ref[0]

    # RoPE via an XLU lane rotate: no MXU pushes, no per-step mask/broadcast.
    q_rot = q * cos + pltpu.roll(q, shift=half, axis=1) * sin
    k_rot = k * cos + pltpu.roll(k, shift=half, axis=1) * sin

    # bf16 outputs in (B, H, S, D) layout for the attention hot loop.
    qo_ref[0, 0] = q_rot.astype(qo_ref.dtype)
    ko_ref[0, 0] = k_rot.astype(ko_ref.dtype)
    vo_ref[0, 0] = v.astype(vo_ref.dtype)

    # Fused memory-state update: resident accumulator over the seq-tile axis
    # (f32 for accuracy; this pass is HBM-bound so MXU multi-pass is hidden).
    @pl.when(j == 0)
    def _state_init():
        newm_ref[0, 0] = m_old_ref[0]
        newz_ref[0, 0] = z_old_ref[0]

    sigma_k = _elu_p1(k_rot)
    newm_ref[0, 0] += jnp.einsum('kd,ke->de', sigma_k, v,
                                 preferred_element_type=jnp.float32)
    newz_ref[0, 0] += jnp.sum(sigma_k, axis=0, keepdims=True)


def rope_memory_prepass(qkv, cos_pos, sin_signed, M, z, *, num_heads,
                        num_kv_heads, head_dim, ts=256):
    """RoPE + (B,S,H*D)->(B,H,S,D) relayout + memory update in one HBM pass."""
    B, S, _ = qkv.shape
    H, Hkv, D = num_heads, num_kv_heads, head_dim
    assert Hkv == H, "memory-update broadcast requires num_kv_heads == num_heads"
    ts = _pick_tile(S, ts)
    n_st = S // ts
    z_r = z.reshape(Hkv, 1, D)

    kernel = functools.partial(_rope_memory_kernel, half=D // 2)
    cost = pl.CostEstimate(
        flops=int(2 * B * Hkv * S * D * D + 12 * B * S * (H + Hkv) * D),
        transcendentals=int(B * Hkv * S * D),
        bytes_accessed=int(4 * B * S * (H + 2 * Hkv) * D + 8 * B * S * D
                           + 2 * B * (H + 2 * Hkv) * S * D
                           + 8 * B * Hkv * D * (D + 1)))

    return pl.pallas_call(
        kernel,
        out_shape=(
            jax.ShapeDtypeStruct((B, H, S, D), jnp.bfloat16),     # rotated Q
            jax.ShapeDtypeStruct((B, Hkv, S, D), jnp.bfloat16),   # rotated K
            jax.ShapeDtypeStruct((B, Hkv, S, D), jnp.bfloat16),   # V (relayout)
            jax.ShapeDtypeStruct((B, Hkv, D, D), jnp.float32),    # updated M
            jax.ShapeDtypeStruct((B, Hkv, 1, D), jnp.float32),    # updated z
        ),
        grid=(B, H, n_st),
        in_specs=[
            # head slab selection / layout change is done by the index maps.
            pl.BlockSpec((1, ts, D), lambda b, h, j: (b, j, h)),               # q
            pl.BlockSpec((1, ts, D), lambda b, h, j: (b, j, num_heads + h)),   # k
            pl.BlockSpec((1, ts, D),
                         lambda b, h, j: (b, j, num_heads + num_kv_heads + h)),  # v
            pl.BlockSpec((1, ts, D), lambda b, h, j: (b, j, 0)),               # cos
            pl.BlockSpec((1, ts, D), lambda b, h, j: (b, j, 0)),               # sin
            pl.BlockSpec((1, D, D), lambda b, h, j: (h, 0, 0)),                # old M
            pl.BlockSpec((1, 1, D), lambda b, h, j: (h, 0, 0)),                # old z
        ],
        out_specs=(
            pl.BlockSpec((1, 1, ts, D), lambda b, h, j: (b, h, j, 0)),
            pl.BlockSpec((1, 1, ts, D), lambda b, h, j: (b, h, j, 0)),
            pl.BlockSpec((1, 1, ts, D), lambda b, h, j: (b, h, j, 0)),
            pl.BlockSpec((1, 1, D, D), lambda b, h, j: (b, h, 0, 0)),
            pl.BlockSpec((1, 1, 1, D), lambda b, h, j: (b, h, 0, 0)),
        ),
        compiler_params=pltpu.CompilerParams(
            dimension_semantics=("parallel", "parallel", "arbitrary")),
        cost_estimate=cost,
    )(qkv, qkv, qkv, cos_pos, sin_signed, M, z_r)


# ---------------- flash-style InfiniAttention kernel ----------------
def _infini_attn_kernel(beta_ref, q_ref, k_ref, v_ref, m_old_ref, z_old_ref,
                        wo_ref, o_ref, m_sc, l_sc, acc_sc, *, scale):
    kt = pl.program_id(2)

    @pl.when(kt == 0)
    def _init():
        m_sc[...] = jnp.full(m_sc.shape, -jnp.inf, jnp.float32)
        l_sc[...] = jnp.zeros(l_sc.shape, jnp.float32)
        acc_sc[...] = jnp.zeros(acc_sc.shape, jnp.float32)

    q = q_ref[0]                                  # (H, TQ, D) bf16, pre-rotated
    k = k_ref[0]                                  # (H, TK, D) bf16, pre-rotated
    v = v_ref[0]                                  # (H, TK, D) bf16

    # flash online softmax (attention_mask=None -> non-causal, no dropout);
    # bf16 MXU operands, f32 accumulation.
    s = jnp.einsum('hqd,hkd->hqk', q, k,
                   preferred_element_type=jnp.float32) * scale
    m_prev = m_sc[...]
    m_new = jnp.maximum(m_prev, jnp.max(s, axis=-1, keepdims=True))
    alpha = jnp.exp(m_prev - m_new)
    p = jnp.exp(s - m_new)
    l_sc[...] = alpha * l_sc[...] + jnp.sum(p, axis=-1, keepdims=True)
    acc_sc[...] = alpha * acc_sc[...] + jnp.einsum(
        'hqk,hkd->hqd', p.astype(jnp.bfloat16), v,
        preferred_element_type=jnp.float32)
    m_sc[...] = m_new

    # finalize: memory retrieval (OLD M, z), beta mix, fused o_proj epilogue.
    @pl.when(kt == pl.num_programs(2) - 1)
    def _finalize():
        sigma_q = _elu_p1(q_ref[0].astype(jnp.float32))          # (H, TQ, D)
        mem_num = jnp.einsum('hqd,hde->hqe', sigma_q, m_old_ref[...],
                             preferred_element_type=jnp.float32)
        mem_den = jnp.sum(sigma_q * z_old_ref[...], axis=-1, keepdims=True) + 1e-8
        a_mem = mem_num / mem_den            # exact divide: finalize-only
        attn = acc_sc[...] * pl.reciprocal(l_sc[...], approx=True)

        beta = beta_ref[0]
        combined = (beta * a_mem + (1.0 - beta) * attn).astype(jnp.bfloat16)

        # fused o_proj: single batched contraction + head sum (no per-head
        # Python loop); lane-dense (TQ, hidden) store.
        out = jnp.einsum('hqd,hdn->hqn', combined, wo_ref[...],
                         preferred_element_type=jnp.float32)
        o_ref[0] = jnp.sum(out, axis=0).astype(o_ref.dtype)


def infini_attention_core(q_rot, k_rot, v_t, M, z, wo, beta_sig, *,
                          tq=256, tk=256):
    """q_rot/k_rot/v_t: (B,H,S,D) bf16; M: (H,D,D); z: (H,D); wo: (H*D, hidden)."""
    B, H, S, D = q_rot.shape
    hidden = wo.shape[1]
    tq = _pick_tile(S, tq)
    tk = _pick_tile(S, tk)
    n_qt, n_kt = S // tq, S // tk

    wo_r = wo.reshape(H, D, hidden).astype(jnp.bfloat16)   # bf16 MXU operand
    z_r = z.reshape(H, 1, D)

    kernel = functools.partial(_infini_attn_kernel, scale=1.0 / math.sqrt(D))
    cost = pl.CostEstimate(
        flops=int(4 * B * H * S * S * D + 2 * B * H * S * D * D
                  + 2 * B * S * H * D * hidden),
        transcendentals=int(B * H * S * (S + D)),
        bytes_accessed=int(2 * 3 * B * H * S * D + 4 * B * S * hidden
                           + 4 * H * D * (D + 1) + 2 * H * D * hidden))

    return pl.pallas_call(
        kernel,
        out_shape=jax.ShapeDtypeStruct((B, S, hidden), jnp.float32),
        grid=(B, n_qt, n_kt),
        in_specs=[
            pl.BlockSpec(memory_space=pltpu.MemorySpace.SMEM),             # beta
            pl.BlockSpec((1, H, tq, D), lambda b, i, j: (b, 0, i, 0)),     # q_rot
            pl.BlockSpec((1, H, tk, D), lambda b, i, j: (b, 0, j, 0)),     # k_rot
            pl.BlockSpec((1, H, tk, D), lambda b, i, j: (b, 0, j, 0)),     # v
            pl.BlockSpec((H, D, D), lambda b, i, j: (0, 0, 0)),            # old M
            pl.BlockSpec((H, 1, D), lambda b, i, j: (0, 0, 0)),            # old z
            pl.BlockSpec((H, D, hidden), lambda b, i, j: (0, 0, 0)),       # o_proj W
        ],
        out_specs=pl.BlockSpec((1, tq, hidden), lambda b, i, j: (b, i, 0)),
        scratch_shapes=[
            pltpu.VMEM((H, tq, 1), jnp.float32),   # running max
            pltpu.VMEM((H, tq, 1), jnp.float32),   # running denom
            pltpu.VMEM((H, tq, D), jnp.float32),   # attention accumulator
        ],
        # memory-state update now lives in the pre-pass, so the q-tile axis is
        # free to be "parallel" (both v7x TensorCores busy even at small B).
        compiler_params=pltpu.CompilerParams(
            dimension_semantics=("parallel", "parallel", "arbitrary"),
            vmem_limit_bytes=64 * 1024 * 1024),
        cost_estimate=cost,
    )(beta_sig, q_rot, k_rot, v_t, M, z_r, wo_r)


# ---------------- plain-JAX glue ----------------
def rotary_cos_sin(head_dim, seq_len, base):
    inv_freq = 1.0 / (base ** (jnp.arange(0, head_dim, 2, dtype=jnp.float32) / head_dim))
    t = jnp.arange(seq_len, dtype=jnp.float32)
    freqs = jnp.outer(t, inv_freq)
    emb = jnp.concatenate([freqs, freqs], axis=-1)
    return jnp.cos(emb), jnp.sin(emb)


def infini_attention_forward(params, hidden_states, M, z, position_ids, *,
                             ts=256, tq=256, tk=256):
    B, S, _ = hidden_states.shape
    x2d = hidden_states.reshape(B * S, HIDDEN)

    # fused q/k/v projection in a single tiled Pallas matmul
    wqkv = jnp.concatenate([params["wq"], params["wk"], params["wv"]], axis=1)
    bqkv = jnp.concatenate([params["bq"], params["bk"], params["bv"]], axis=0)
    qkv = pallas_linear(x2d, wqkv, bqkv).reshape(B, S, -1)
    # No wrapper-side reshape+transpose of q/k/v: the (B,S,H*D) -> (B,H,S,D)
    # relayout happens inside the pre-pass via BlockSpec index maps.

    cos, sin = rotary_cos_sin(HEAD_DIM, S, ROPE_THETA)
    cos_pos = cos[position_ids]                                  # (B, S, D)
    half = HEAD_DIM // 2
    sign = jnp.concatenate([-jnp.ones((half,), jnp.float32),
                            jnp.ones((half,), jnp.float32)])
    # rotate_half(x) * sin  ==  roll(x, D//2) * (sign * sin)
    sin_signed = sin[position_ids] * sign

    q_rot, k_rot, v_t, new_M, new_z = rope_memory_prepass(
        qkv, cos_pos, sin_signed, M, z,
        num_heads=NUM_HEADS, num_kv_heads=NUM_KV_HEADS, head_dim=HEAD_DIM,
        ts=ts)

    beta_sig = jax.nn.sigmoid(params["beta"]).reshape(1).astype(jnp.float32)

    out = infini_attention_core(q_rot, k_rot, v_t, M, z, params["wo"],
                                beta_sig, tq=tq, tk=tk)
    return out, new_M, new_z.reshape(B, NUM_KV_HEADS, HEAD_DIM)


# ---------------- pure-JAX reference (for correctness check) ----------------
def reference_forward(params, hidden_states, M, z, position_ids):
    with jax.default_matmul_precision("highest"):
        B, S, _ = hidden_states.shape
        q = (hidden_states @ params["wq"] + params["bq"]).reshape(
            B, S, NUM_HEADS, HEAD_DIM).transpose(0, 2, 1, 3)
        k = (hidden_states @ params["wk"] + params["bk"]).reshape(
            B, S, NUM_KV_HEADS, HEAD_DIM).transpose(0, 2, 1, 3)
        v = (hidden_states @ params["wv"] + params["bv"]).reshape(
            B, S, NUM_KV_HEADS, HEAD_DIM).transpose(0, 2, 1, 3)

        cos, sin = rotary_cos_sin(HEAD_DIM, S, ROPE_THETA)
        cos_p = cos[position_ids][:, None, :, :]
        sin_p = sin[position_ids][:, None, :, :]

        def rotate_half(x):
            d = x.shape[-1] // 2
            return jnp.concatenate([-x[..., d:], x[..., :d]], axis=-1)

        q = q * cos_p + rotate_half(q) * sin_p
        k = k * cos_p + rotate_half(k) * sin_p

        # memory retrieval with OLD M, z
        sigma_q = jax.nn.elu(q) + 1.0
        mem_num = jnp.einsum("bhsd,hde->bhse", sigma_q, M)
        mem_den = jnp.einsum("bhsd,hd->bhs", sigma_q, z)[..., None] + 1e-8
        a_mem = mem_num / mem_den

        # memory-state update (uses rotated K, per the PyTorch forward order)
        sigma_k = jax.nn.elu(k) + 1.0
        new_M = M + jnp.einsum("bhsd,bhse->bhde", sigma_k, v)
        new_z = z + jnp.sum(sigma_k, axis=-2)

        scale = 1.0 / math.sqrt(HEAD_DIM)
        s = jnp.einsum("bhqd,bhkd->bhqk", q, k) * scale
        p = jax.nn.softmax(s, axis=-1)
        attn = jnp.einsum("bhqk,bhkd->bhqd", p, v)

        beta = jax.nn.sigmoid(params["beta"])
        combined = beta * a_mem + (1.0 - beta) * attn
        combined = combined.transpose(0, 2, 1, 3).reshape(B, S, HIDDEN)
        out = combined @ params["wo"]          # o_proj has bias=False
        return out, new_M, new_z


# ---------------- main ----------------
if __name__ == "__main__":
    key = jax.random.PRNGKey(0)
    ks = jax.random.split(key, 12)

    params = {
        "wq": 0.05 * jax.random.normal(ks[0], (HIDDEN, NUM_HEADS * HEAD_DIM), jnp.float32),
        "bq": 0.05 * jax.random.normal(ks[1], (NUM_HEADS * HEAD_DIM,), jnp.float32),
        "wk": 0.05 * jax.random.normal(ks[2], (HIDDEN, NUM_KV_HEADS * HEAD_DIM), jnp.float32),
        "bk": 0.05 * jax.random.normal(ks[3], (NUM_KV_HEADS * HEAD_DIM,), jnp.float32),
        "wv": 0.05 * jax.random.normal(ks[4], (HIDDEN, NUM_KV_HEADS * HEAD_DIM), jnp.float32),
        "bv": 0.05 * jax.random.normal(ks[5], (NUM_KV_HEADS * HEAD_DIM,), jnp.float32),
        "wo": 0.05 * jax.random.normal(ks[6], (NUM_HEADS * HEAD_DIM, HIDDEN), jnp.float32),
        "beta": jax.random.normal(ks[7], (1,), jnp.float32),
    }

    x = jax.random.normal(ks[8], (BATCH, SEQ, HIDDEN), jnp.float32)
    # Memory buffers: zeros at module init; small nonzero synthetic state so
    # the retrieval path is exercised (forward semantics hold for any contents).
    M = 0.1 * jax.random.uniform(ks[9], (NUM_HEADS, HEAD_DIM, HEAD_DIM), jnp.float32)
    z = 0.1 * jax.random.uniform(ks[10], (NUM_HEADS, HEAD_DIM), jnp.float32)
    position_ids = jnp.broadcast_to(jnp.arange(SEQ, dtype=jnp.int32), (BATCH, SEQ))

    # small tiles so the multi-tile (init / accumulate / finalize) grid paths
    # are actually exercised at the toy sequence length.
    out, new_M, new_z = infini_attention_forward(params, x, M, z, position_ids,
                                                 ts=8, tq=8, tk=8)
    out = jax.block_until_ready(out)

    ref_out, ref_M, ref_z = reference_forward(params, x, M, z, position_ids)
    # attention output runs with bf16 MXU operands + approx reciprocal ->
    # looser tolerance; memory-state path is f32-exact -> tight tolerance.
    np.testing.assert_allclose(np.asarray(out), np.asarray(ref_out),
                               rtol=2e-2, atol=3e-2)
    np.testing.assert_allclose(np.asarray(new_M), np.asarray(ref_M),
                               rtol=1e-3, atol=1e-3)
    np.testing.assert_allclose(np.asarray(new_z), np.asarray(ref_z),
                               rtol=1e-3, atol=1e-3)

    print("KERNEL_OK")
</pallas_src>

<mosaic_0001>
module attributes {stable_mosaic.version = 11 : i64} {
  func.func @_matmul_bias_kernel(%arg0: i32, %arg1: i32, %arg2: i32, %arg3: memref<32x256xf32, #tpu.memory_space<vmem>>, %arg4: memref<256x256xf32, #tpu.memory_space<vmem>>, %arg5: memref<1x256xf32, #tpu.memory_space<vmem>>, %arg6: memref<32x256xf32, #tpu.memory_space<vmem>>, %arg7: memref<32x256xf32, #tpu.memory_space<vmem>>) attributes {dimension_semantics = [#tpu.dimension_semantics<parallel>, #tpu.dimension_semantics<parallel>, #tpu.dimension_semantics<arbitrary>], iteration_bounds = array<i64: 1, 3, 1>, scalar_prefetch = 0 : i64, scratch_operands = 1 : i64, tpu.core_type = #tpu.core_type<tc>, window_params = [{transform_indices = @transform_0, window_bounds = array<i64: 32, 256>}, {transform_indices = @transform_1, window_bounds = array<i64: 256, 256>}, {transform_indices = @transform_2, window_bounds = array<i64: 1, 256>}, {transform_indices = @transform_3, window_bounds = array<i64: 32, 256>}]} {
    %c0_i32 = arith.constant 0 : i32
    %0 = arith.cmpi eq, %arg2, %c0_i32 : i32
    %1 = arith.extui %0 : i1 to i32
    %c0_i32_0 = arith.constant 0 : i32
    %2 = arith.cmpi ne, %1, %c0_i32_0 : i32
    scf.if %2 {
      %cst_10 = arith.constant 0.000000e+00 : f32
      %12 = vector.broadcast %cst_10 : f32 to vector<32x256xf32>
      %c0_11 = arith.constant 0 : index
      %c0_12 = arith.constant 0 : index
      %13 = vector.load %arg7[%c0_11, %c0_12] : memref<32x256xf32, #tpu.memory_space<vmem>>, vector<32x256xf32>
      tpu.vector_store %arg7[%c0_11, %c0_12], %12 {strides = array<i32>} : memref<32x256xf32, #tpu.memory_space<vmem>>, vector<32x256xf32>,
    } else {
    }
    %c0 = arith.constant 0 : index
    %c0_1 = arith.constant 0 : index
    %3 = vector.load %arg7[%c0, %c0_1] : memref<32x256xf32, #tpu.memory_space<vmem>>, vector<32x256xf32>
    %c0_2 = arith.constant 0 : index
    %c0_3 = arith.constant 0 : index
    %4 = vector.load %arg3[%c0_2, %c0_3] : memref<32x256xf32, #tpu.memory_space<vmem>>, vector<32x256xf32>
    %c0_4 = arith.constant 0 : index
    %c0_5 = arith.constant 0 : index
    %5 = vector.load %arg4[%c0_4, %c0_5] : memref<256x256xf32, #tpu.memory_space<vmem>>, vector<256x256xf32>
    %cst = arith.constant dense<0.000000e+00> : vector<32x256xf32>
    %6 = tpu.matmul %4, %5, %cst {dimension_numbers = #tpu.dot_dimension_numbers<[1], [0], [0], [1], [0, 0, 1, 1], [], []>} : vector<32x256xf32>, vector<256x256xf32>, vector<32x256xf32> -> vector<32x256xf32>
    %7 = arith.addf %3, %6 : vector<32x256xf32>
    %c0_6 = arith.constant 0 : index
    %c0_7 = arith.constant 0 : index
    %8 = vector.load %arg7[%c0_6, %c0_7] : memref<32x256xf32, #tpu.memory_space<vmem>>, vector<32x256xf32>
    tpu.vector_store %arg7[%c0_6, %c0_7], %7 {strides = array<i32>} : memref<32x256xf32, #tpu.memory_space<vmem>>, vector<32x256xf32>,
    %c0_i32_8 = arith.constant 0 : i32
    %9 = arith.cmpi eq, %arg2, %c0_i32_8 : i32
    %10 = arith.extui %9 : i1 to i32
    %c0_i32_9 = arith.constant 0 : i32
    %11 = arith.cmpi ne, %10, %c0_i32_9 : i32
    scf.if %11 {
      %c0_10 = arith.constant 0 : index
      %c0_11 = arith.constant 0 : index
      %12 = vector.load %arg7[%c0_10, %c0_11] : memref<32x256xf32, #tpu.memory_space<vmem>>, vector<32x256xf32>
      %c0_12 = arith.constant 0 : index
      %c0_13 = arith.constant 0 : index
      %13 = vector.load %arg5[%c0_12, %c0_13] : memref<1x256xf32, #tpu.memory_space<vmem>>, vector<1x256xf32>
      %14 = vector.broadcast %13 : vector<1x256xf32> to vector<32x256xf32>
      %15 = arith.addf %12, %14 : vector<32x256xf32>
      %c0_14 = arith.constant 0 : index
      %c0_15 = arith.constant 0 : index
      %16 = vector.load %arg6[%c0_14, %c0_15] : memref<32x256xf32, #tpu.memory_space<vmem>>, vector<32x256xf32>
      tpu.vector_store %arg6[%c0_14, %c0_15], %15 {strides = array<i32>} : memref<32x256xf32, #tpu.memory_space<vmem>>, vector<32x256xf32>,
    } else {
    }
    return
  }
  func.func @transform_0(%arg0: i32, %arg1: i32, %arg2: i32) -> (i32, i32) {
    %c0_i32 = arith.constant 0 : i32
    return %arg0, %arg2 : i32, i32
  }
  func.func @transform_1(%arg0: i32, %arg1: i32, %arg2: i32) -> (i32, i32) {
    %c0_i32 = arith.constant 0 : i32
    return %arg2, %arg1 : i32, i32
  }
  func.func @transform_2(%arg0: i32, %arg1: i32, %arg2: i32) -> (i32, i32) {
    %c0_i32 = arith.constant 0 : i32
    %c0_i32_0 = arith.constant 0 : i32
    return %c0_i32, %arg1 : i32, i32
  }
  func.func @transform_3(%arg0: i32, %arg1: i32, %arg2: i32) -> (i32, i32) {
    %c0_i32 = arith.constant 0 : i32
    return %arg0, %arg1 : i32, i32
  }
}

</mosaic_0001>

<llo_original>
// kernel: tpu_custom_call.1
$region0: #{tpu_custom_call.1}
  #allocation0 [shape = 'u32[]', space=smem, size = 0x4, offset = 0x4, fixed_abs, tag = 'smem constant byte address 0x4 - core index']
  #allocation1 [shape = 'u32[72,128]{1,0:T(1,128)}', space=vmem, size = 0x9000, scoped, tag = 'internal scratch']
  #allocation2 [shape = 'f32[32,256]{1,0:T(8,128)}', space=vmem, size = 0x8000, scoped, tag = 'scratch operand']
  %s0 = inlined_call_operand.hbm [shape: f32[32,256], index: 0, kind: input, shape index: {}]
  %s1 = inlined_call_operand.hbm [shape: f32[256,768], index: 1, kind: input, shape index: {}]
  %s2 = inlined_call_operand.hbm [shape: f32[1,768], index: 2, kind: input, shape index: {}]
  %s3 = inlined_call_operand.hbm [shape: f32[32,768], index: 3, kind: output, shape index: {}]
  %s4 = sld [smem:[#allocation0]]
  $region65: #{tpu_custom_call.1} parent=0
    _
  %s6 = ssub.s32 1, %s4
  %s7 = scalar_select 0, %s6, %s4
  $region1: #{tpu_custom_call.1} parent=0
    #allocation3 [shape = 'u8[32768]{0}', space=vmem, size = 0x8000, scoped, tag = 'input window, operand 0, single buffered']
    #allocation4 [shape = 's32[2]{0}', space=sflag, size = 0x8, scoped, tag = 'scoped memory for tpu_custom_call.1']
    #allocation5 [shape = 's32[2]{0}', space=sflag, size = 0x8, scoped, tag = 'scoped memory for tpu_custom_call.1']
    #allocation6 [shape = 'u8[524288]{0}', space=vmem, size = 0x80000, scoped, tag = 'input window, operand 1']
    #allocation7 [shape = 's32[2]{0}', space=sflag, size = 0x8, scoped, tag = 'scoped memory for tpu_custom_call.1']
    #allocation8 [shape = 'u8[2048]{0}', space=vmem, size = 0x800, scoped, tag = 'input window, operand 2']
    #allocation9 [shape = 'u8[65536]{0}', space=vmem, size = 0x10000, scoped, tag = 'output window, operand 0']
    %8 = vsyncpa [#allocation4], 0
    %9 = vsyncpa [#allocation7], 0
    %s10 = scalar_lea.sflag [#allocation7], 1
    %11 = vsyncpa %s10, 0
    %12 = vsyncpa [#allocation5], 0
    %s13 = scalar_lea.sflag [#allocation5], 1
    %14 = vsyncpa %s13, 0
    loop: start=0, step=1, limit=5
    $region2: #{tpu_custom_call.1} parent=1 // loop_pre_header
      _
    $region3: #{tpu_custom_call.1} parent=1 // loop_header
      %s16 = sphi 0, %s20
      %p17 = scmp.ge.s32.totalorder %s16, 5
      %s23 = sphi 0, %s42
      %s24 = sphi 0, %s38
      %s25 = sphi 0, %s34
      %s26 = sphi 0, %s23
      %s27 = sphi 0, %s24
      %s28 = sphi 0, %s25
      %s29 = sphi 0, %s26
      %s30 = sphi 0, %s27
      %s31 = sphi 0, %s28
      %s47 = sphi 0, %s49
      %s50 = sphi 0, %s47
      %s51 = sphi 0, %s50
      %s67 = sphi 0, %s51
      %s75 = sphi 0, %s77
      %s78 = sphi 0, %s75
      %s79 = sphi 0, %s78
      %s95 = sphi 0, %s79
      %s101 = sphi 0, %s103
      %s104 = sphi 0, %s101
      %s105 = sphi 0, %s104
      %s121 = sphi 0, %s105
      %s129 = sphi 0, %s131
      %s132 = sphi 0, %s129
      %s133 = sphi 0, %s132
      %s149 = sphi 0, %s133
    $region4: #{tpu_custom_call.1} parent=1 // loop_header_branch
      %19 = sbr.rel (%p17) target = $region8
    $region5: #{tpu_custom_call.1} parent=1 // loop_body
      %s21 = ssub.s32 %s16, 1
      %s22 = ssub.s32 %s16, 2
      %s32 = sadd.s32 1, %s25
      %p33 = scmp.ge.s32.totalorder %s32, 1
      %s34 = scalar_select %p33, 0, %s32
      %s35 = sadd.s32 1, %s24
      %s36 = scalar_select %p33, %s35, %s24
      %p37 = scmp.ge.s32.totalorder %s36, 3
      %s38 = scalar_select %p37, 0, %s36
      %s39 = sadd.s32 1, %s23
      %s40 = scalar_select %p37, %s39, %s23
      %p41 = scmp.ge.s32.totalorder %s40, 1
      %s42 = scalar_select %p41, 0, %s40
      %s43 = ssub.s32 %s23, %s42
      %s44 = ssub.s32 %s25, %s34
      %s45 = sor.u32 %s43, %s44
      %p46 = scmp.eq.s32.totalorder %s45, 0
      %s48 = sadd.s32 %s47, 1
      %s49 = scalar_select %p46, %s47, %s48
      %p52 = pneg %p46
      %p53 = scmp.eq.s32.totalorder %s16, 2
      %p54 = por %p52, %p53
      %p55 = scmp.ne.s32.totalorder %s47, %s50
      %p56 = scmp.eq.s32.totalorder %s16, 0
      %p57 = por %p55, %p56
      %p58 = scmp.ne.s32.totalorder %s47, %s50
      %p59 = scmp.eq.s32.totalorder %s21, 2
      %p60 = por %p58, %p59
      %p61 = scmp.ne.s32.totalorder %s50, %s51
      %p62 = scmp.eq.s32.totalorder %s21, 0
      %p63 = por %p61, %p62
      %p64 = scmp.ne.s32.totalorder %s50, %s51
      %p65 = scmp.eq.s32.totalorder %s22, 2
      %p66 = por %p64, %p65
      %p68 = scmp.ne.s32.totalorder %s51, %s67
      %p69 = scmp.eq.s32.totalorder %s22, 0
      %p70 = por %p68, %p69
      %s71 = ssub.s32 %s25, %s34
      %s72 = ssub.s32 %s24, %s38
      %s73 = sor.u32 %s71, %s72
      %p74 = scmp.eq.s32.totalorder %s73, 0
      %s76 = sadd.s32 %s75, 1
      %s77 = scalar_select %p74, %s75, %s76
      %p80 = pneg %p74
      %p81 = scmp.eq.s32.totalorder %s16, 2
      %p82 = por %p80, %p81
      %p83 = scmp.ne.s32.totalorder %s75, %s78
      %p84 = scmp.eq.s32.totalorder %s16, 0
      %p85 = por %p83, %p84
      %p86 = scmp.ne.s32.totalorder %s75, %s78
      %p87 = scmp.eq.s32.totalorder %s21, 2
      %p88 = por %p86, %p87
      %p89 = scmp.ne.s32.totalorder %s78, %s79
      %p90 = scmp.eq.s32.totalorder %s21, 0
      %p91 = por %p89, %p90
      %p92 = scmp.ne.s32.totalorder %s78, %s79
      %p93 = scmp.eq.s32.totalorder %s22, 2
      %p94 = por %p92, %p93
      %p96 = scmp.ne.s32.totalorder %s79, %s95
      %p97 = scmp.eq.s32.totalorder %s22, 0
      %p98 = por %p96, %p97
      %s99 = ssub.s32 %s24, %s38
      %p100 = scmp.eq.s32.totalorder %s99, 0
      %s102 = sadd.s32 %s101, 1
      %s103 = scalar_select %p100, %s101, %s102
      %p106 = pneg %p100
      %p107 = scmp.eq.s32.totalorder %s16, 2
      %p108 = por %p106, %p107
      %p109 = scmp.ne.s32.totalorder %s101, %s104
      %p110 = scmp.eq.s32.totalorder %s16, 0
      %p111 = por %p109, %p110
      %p112 = scmp.ne.s32.totalorder %s101, %s104
      %p113 = scmp.eq.s32.totalorder %s21, 2
      %p114 = por %p112, %p113
      %p115 = scmp.ne.s32.totalorder %s104, %s105
      %p116 = scmp.eq.s32.totalorder %s21, 0
      %p117 = por %p115, %p116
      %p118 = scmp.ne.s32.totalorder %s104, %s105
      %p119 = scmp.eq.s32.totalorder %s22, 2
      %p120 = por %p118, %p119
      %p122 = scmp.ne.s32.totalorder %s105, %s121
      %p123 = scmp.eq.s32.totalorder %s22, 0
      %p124 = por %p122, %p123
      %s125 = ssub.s32 %s23, %s42
      %s126 = ssub.s32 %s24, %s38
      %s127 = sor.u32 %s125, %s126
      %p128 = scmp.eq.s32.totalorder %s127, 0
      %s130 = sadd.s32 %s129, 1
      %s131 = scalar_select %p128, %s129, %s130
      %p134 = pneg %p128
      %p135 = scmp.eq.s32.totalorder %s16, 2
      %p136 = por %p134, %p135
      %p137 = scmp.ne.s32.totalorder %s129, %s132
      %p138 = scmp.eq.s32.totalorder %s16, 0
      %p139 = por %p137, %p138
      %p140 = scmp.ne.s32.totalorder %s129, %s132
      %p141 = scmp.eq.s32.totalorder %s21, 2
      %p142 = por %p140, %p141
      %p143 = scmp.ne.s32.totalorder %s132, %s133
      %p144 = scmp.eq.s32.totalorder %s21, 0
      %p145 = por %p143, %p144
      %p146 = scmp.ne.s32.totalorder %s132, %s133
      %p147 = scmp.eq.s32.totalorder %s22, 2
      %p148 = por %p146, %p147
      %p150 = scmp.ne.s32.totalorder %s133, %s149
      %p151 = scmp.eq.s32.totalorder %s22, 0
      %p152 = por %p150, %p151
      %p153 = scmp.le.s32.totalorder 1, %s16
      %p154 = scmp.lt.s32.totalorder %s16, 4
      %p155 = pnand %p153, %p154
      %p156 = pneg %p155
      // Predicated region
      $region9: #{tpu_custom_call.1} parent=5 // pred_check
        _
      $region10: #{tpu_custom_call.1} parent=5 // pred_check_branch
        %158 = sbr.rel (%p155) target = $region12
      $region11: #{tpu_custom_call.1} parent=5 // pred_region
        %s159 = ssub.s32 %s16, 1
        // Predicated region
        $region13: #{tpu_custom_call.1} parent=11 // pred_check
          %p160 = pneg %p63
        $region14: #{tpu_custom_call.1} parent=11 // pred_check_branch
          %162 = sbr.rel (%p160) target = $region16
        $region15: #{tpu_custom_call.1} parent=11 // pred_region
          %s163 = smul.u32 4, %s26
          %s164 = smul.u32 2, %s28
          %166 = vsyncadd [#allocation4], 0
          %s167 = smul.addr %s163, 2
          %s168 = sadd.s32 %s164, %s167
          %s169 = smul.addr %s168, 8
          %s170 = scalar_lea.hbm %s0, %s169
          %s171 = sshll.u32 %s170, 4
          %s172 = int_to_ptr.hbm [resolvable:$true] %s171
          %s173 = sshll.u32 [#allocation3], 4
          %s174 = int_to_ptr.vmem [resolvable:$true] %s173
          %179 = dma.hbm_to_vmem [thread:$0]  %s172, 1024, %s174, [#allocation4], 256, 256, 16
        $region16: #{tpu_custom_call.1} parent=11 // pred_fallthru
          _
      $region12: #{tpu_custom_call.1} parent=5 // pred_fallthru
        _
      %p180 = scmp.lt.s32.totalorder %s16, 3
      // Predicated region
      $region17: #{tpu_custom_call.1} parent=5 // pred_check
        %p181 = pneg %p180
      $region18: #{tpu_custom_call.1} parent=5 // pred_check_branch
        %183 = sbr.rel (%p181) target = $region20
      $region19: #{tpu_custom_call.1} parent=5 // pred_region
        // Predicated region
        $region21: #{tpu_custom_call.1} parent=19 // pred_check
          %p184 = pneg %p85
        $region22: #{tpu_custom_call.1} parent=19 // pred_check_branch
          %186 = sbr.rel (%p184) target = $region24
        $region23: #{tpu_custom_call.1} parent=19 // pred_region
          %s187 = sand.u32 %s16, 1
          %s188 = scalar_lea.sflag [#allocation7], %s187
          %s189 = sand.u32 %s75, 1
          %s190 = smul.addr %s189, 512
          %s191 = scalar_lea.vmem [#allocation6], %s190
          %s192 = smul.u32 32, %s25
          %s193 = smul.u32 2, %s24
          %195 = vsyncadd %s188, 0
          %s196 = smul.addr %s192, 6
          %s197 = sadd.s32 %s193, %s196
          %s198 = smul.addr %s197, 8
          %s199 = scalar_lea.hbm %s1, %s198
          %s200 = sshll.u32 %s199, 4
          %s201 = int_to_ptr.hbm [resolvable:$true] %s200
          %s202 = sshll.u32 %s191, 4
          %s203 = int_to_ptr.vmem [resolvable:$true] %s202
          %208 = dma.hbm_to_vmem [thread:$0]  %s201, 8192, %s203, %s188, 768, 256, 16
        $region24: #{tpu_custom_call.1} parent=19 // pred_fallthru
          _
        // Predicated region
        $region25: #{tpu_custom_call.1} parent=19 // pred_check
          %p209 = pneg %p111
        $region26: #{tpu_custom_call.1} parent=19 // pred_check_branch
          %211 = sbr.rel (%p209) target = $region28
        $region27: #{tpu_custom_call.1} parent=19 // pred_region
          %s212 = sand.u32 %s16, 1
          %s213 = scalar_lea.sflag [#allocation7], %s212
          %s214 = sand.u32 %s101, 1
          %s215 = smul.addr %s214, 2
          %s216 = scalar_lea.vmem [#allocation8], %s215
          %s217 = smul.u32 2, %s24
          %219 = vsyncadd %s213, 0
          %s220 = scalar_lea.hbm %s2, %s217
          %s222 = sshll.u32 %s220, 4
          %s223 = int_to_ptr.hbm [resolvable:$true] %s222
          %s224 = sshll.u32 %s216, 4
          %s225 = int_to_ptr.vmem [resolvable:$true] %s224
          %227 = dma.hbm_to_vmem [thread:$0]  %s223, 32, %s225, %s213
        $region28: #{tpu_custom_call.1} parent=19 // pred_fallthru
          _
      $region20: #{tpu_custom_call.1} parent=5 // pred_fallthru
        _
      %p228 = scmp.le.s32.totalorder 1, %s16
      %p229 = scmp.lt.s32.totalorder %s16, 4
      %p230 = pnand %p228, %p229
      %p231 = pneg %p230
      // Predicated region
      $region29: #{tpu_custom_call.1} parent=5 // pred_check
        _
      $region30: #{tpu_custom_call.1} parent=5 // pred_check_branch
        %233 = sbr.rel (%p230) target = $region32
      $region31: #{tpu_custom_call.1} parent=5 // pred_region
        %s234 = ssub.s32 %s16, 1
        // Predicated region
        $region33: #{tpu_custom_call.1} parent=31 // pred_check
          %p235 = pneg %p63
        $region34: #{tpu_custom_call.1} parent=31 // pred_check_branch
          %237 = sbr.rel (%p235) target = $region36
        $region35: #{tpu_custom_call.1} parent=31 // pred_region
          %239 = dma.done [#allocation4], 1024
        $region36: #{tpu_custom_call.1} parent=31 // pred_fallthru
          _
        %s240 = sand.u32 %s21, 1
        %s241 = scalar_lea.sflag [#allocation7], %s240
        %s242 = sand.u32 %s78, 1
        %s243 = smul.addr %s242, 512
        %s244 = scalar_lea.vmem [#allocation6], %s243
        // Predicated region
        $region37: #{tpu_custom_call.1} parent=31 // pred_check
          %p245 = pneg %p91
        $region38: #{tpu_custom_call.1} parent=31 // pred_check_branch
          %247 = sbr.rel (%p245) target = $region40
        $region39: #{tpu_custom_call.1} parent=31 // pred_region
          %249 = dma.done %s241, 8192
        $region40: #{tpu_custom_call.1} parent=31 // pred_fallthru
          _
        %s250 = sand.u32 %s21, 1
        %s251 = scalar_lea.sflag [#allocation7], %s250
        %s252 = sand.u32 %s104, 1
        %s253 = smul.addr %s252, 2
        %s254 = scalar_lea.vmem [#allocation8], %s253
        // Predicated region
        $region41: #{tpu_custom_call.1} parent=31 // pred_check
          %p255 = pneg %p117
        $region42: #{tpu_custom_call.1} parent=31 // pred_check_branch
          %257 = sbr.rel (%p255) target = $region44
        $region43: #{tpu_custom_call.1} parent=31 // pred_region
          %259 = dma.done %s251, 32
        $region44: #{tpu_custom_call.1} parent=31 // pred_fallthru
          _
        %p260 = pneg %p63
        %p261 = pneg %p60
        %s262 = sand.u32 %s21, 1
        %s263 = scalar_lea.sflag [#allocation7], %s262
        %s264 = sand.u32 %s78, 1
        %s265 = smul.addr %s264, 512
        %s266 = scalar_lea.vmem [#allocation6], %s265
        %p267 = pneg %p91
        %p268 = pneg %p88
        %s269 = sand.u32 %s21, 1
        %s270 = scalar_lea.sflag [#allocation7], %s269
        %s271 = sand.u32 %s104, 1
        %s272 = smul.addr %s271, 2
        %s273 = scalar_lea.vmem [#allocation8], %s272
        %p274 = pneg %p117
        %p275 = pneg %p114
        %p276 = pneg %p145
        %p277 = pneg %p142
        %s278 = sand.u32 %s132, 1
        %s279 = scalar_lea.sflag [#allocation5], %s278
        %s280 = sand.u32 %s132, 1
        %s281 = smul.addr %s280, 64
        %s282 = scalar_lea.vmem [#allocation9], %s281
        %s283 = smul.u32 4, %s26
        %s284 = smul.u32 2, %s28
        %s285 = smul.u32 32, %s28
        %s286 = smul.u32 2, %s27
        %s287 = smul.u32 2, %s27
        %s288 = smul.u32 4, %s26
        %s289 = smul.u32 2, %s27
        %p290 = scmp.eq.s32.totalorder %s28, 0
        // Predicated region
        $region45: #{tpu_custom_call.1} parent=31 // pred_check
          %p291 = pneg %p290
        $region46: #{tpu_custom_call.1} parent=31 // pred_check_branch
          %293 = sbr.rel (%p291) target = $region48
        $region47: #{tpu_custom_call.1} parent=31 // pred_region
          %294 = vst [vmem:[#allocation2] sm:$0xff] 0.0
          %295 = vst [vmem:[#allocation2 + $0x8] sm:$0xff] 0.0
          %296 = vst [vmem:[#allocation2 + $0x10] sm:$0xff] 0.0
          %297 = vst [vmem:[#allocation2 + $0x18] sm:$0xff] 0.0
          %298 = vst [vmem:[#allocation2 + $0x20] sm:$0xff] 0.0
          %299 = vst [vmem:[#allocation2 + $0x28] sm:$0xff] 0.0
          %300 = vst [vmem:[#allocation2 + $0x30] sm:$0xff] 0.0
          %301 = vst [vmem:[#allocation2 + $0x38] sm:$0xff] 0.0
        $region48: #{tpu_custom_call.1} parent=31 // pred_fallthru
          _
        %v302 = vld [vmem:[#allocation2] sm:$0xff]
        %v303 = vld [vmem:[#allocation2 + $0x8] sm:$0xff]
        %v304 = vld [vmem:[#allocation2 + $0x10] sm:$0xff]
        %v305 = vld [vmem:[#allocation2 + $0x18] sm:$0xff]
        %v306 = vld [vmem:[#allocation2 + $0x20] sm:$0xff]
        %v307 = vld [vmem:[#allocation2 + $0x28] sm:$0xff]
        %v308 = vld [vmem:[#allocation2 + $0x30] sm:$0xff]
        %v309 = vld [vmem:[#allocation2 + $0x38] sm:$0xff]
        %v310 = vld [vmem:[#allocation3] sm:$0xff]
        %v311 = vld [vmem:[#allocation3 + $0x8] sm:$0xff]
        %v312 = vld [vmem:[#allocation3 + $0x10] sm:$0xff]
        %v313 = vld [vmem:[#allocation3 + $0x18] sm:$0xff]
        %v314 = vld [vmem:[#allocation3 + $0x20] sm:$0xff]
        %v315 = vld [vmem:[#allocation3 + $0x28] sm:$0xff]
        %v316 = vld [vmem:[#allocation3 + $0x30] sm:$0xff]
        %v317 = vld [vmem:[#allocation3 + $0x38] sm:$0xff]
        %v318 = vld [vmem:[%s244] sm:$0xff]
        %v319 = vld [vmem:[%s244 + $0x8] sm:$0xff]
        %v320 = vld [vmem:[%s244 + $0x10] sm:$0xff]
        %v321 = vld [vmem:[%s244 + $0x18] sm:$0xff]
        %v322 = vld [vmem:[%s244 + $0x20] sm:$0xff]
        %v323 = vld [vmem:[%s244 + $0x28] sm:$0xff]
        %v324 = vld [vmem:[%s244 + $0x30] sm:$0xff]
        %v325 = vld [vmem:[%s244 + $0x38] sm:$0xff]
        %v326 = vld [vmem:[%s244 + $0x40] sm:$0xff]
        %v327 = vld [vmem:[%s244 + $0x48] sm:$0xff]
        %v328 = vld [vmem:[%s244 + $0x50] sm:$0xff]
        %v329 = vld [vmem:[%s244 + $0x58] sm:$0xff]
        %v330 = vld [vmem:[%s244 + $0x60] sm:$0xff]
        %v331 = vld [vmem:[%s244 + $0x68] sm:$0xff]
        %v332 = vld [vmem:[%s244 + $0x70] sm:$0xff]
        %v333 = vld [vmem:[%s244 + $0x78] sm:$0xff]
        %v334 = vld [vmem:[%s244 + $0x80] sm:$0xff]
        %v335 = vld [vmem:[%s244 + $0x88] sm:$0xff]
        %v336 = vld [vmem:[%s244 + $0x90] sm:$0xff]
        %v337 = vld [vmem:[%s244 + $0x98] sm:$0xff]
        %v338 = vld [vmem:[%s244 + $0xa0] sm:$0xff]
        %v339 = vld [vmem:[%s244 + $0xa8] sm:$0xff]
        %v340 = vld [vmem:[%s244 + $0xb0] sm:$0xff]
        %v341 = vld [vmem:[%s244 + $0xb8] sm:$0xff]
        %v342 = vld [vmem:[%s244 + $0xc0] sm:$0xff]
        %v343 = vld [vmem:[%s244 + $0xc8] sm:$0xff]
        %v344 = vld [vmem:[%s244 + $0xd0] sm:$0xff]
        %v345 = vld [vmem:[%s244 + $0xd8] sm:$0xff]
        %v346 = vld [vmem:[%s244 + $0xe0] sm:$0xff]
        %v347 = vld [vmem:[%s244 + $0xe8] sm:$0xff]
        %v348 = vld [vmem:[%s244 + $0xf0] sm:$0xff]
        %v349 = vld [vmem:[%s244 + $0xf8] sm:$0xff]
        %v350 = vld [vmem:[%s244 + $0x100] sm:$0xff]
        %v351 = vld [vmem:[%s244 + $0x108] sm:$0xff]
        %v352 = vld [vmem:[%s244 + $0x110] sm:$0xff]
        %v353 = vld [vmem:[%s244 + $0x118] sm:$0xff]
        %v354 = vld [vmem:[%s244 + $0x120] sm:$0xff]
        %v355 = vld [vmem:[%s244 + $0x128] sm:$0xff]
        %v356 = vld [vmem:[%s244 + $0x130] sm:$0xff]
        %v357 = vld [vmem:[%s244 + $0x138] sm:$0xff]
        %v358 = vld [vmem:[%s244 + $0x140] sm:$0xff]
        %v359 = vld [vmem:[%s244 + $0x148] sm:$0xff]
        %v360 = vld [vmem:[%s244 + $0x150] sm:$0xff]
        %v361 = vld [vmem:[%s244 + $0x158] sm:$0xff]
        %v362 = vld [vmem:[%s244 + $0x160] sm:$0xff]
        %v363 = vld [vmem:[%s244 + $0x168] sm:$0xff]
        %v364 = vld [vmem:[%s244 + $0x170] sm:$0xff]
        %v365 = vld [vmem:[%s244 + $0x178] sm:$0xff]
        %v366 = vld [vmem:[%s244 + $0x180] sm:$0xff]
        %v367 = vld [vmem:[%s244 + $0x188] sm:$0xff]
        %v368 = vld [vmem:[%s244 + $0x190] sm:$0xff]
        %v369 = vld [vmem:[%s244 + $0x198] sm:$0xff]
        %v370 = vld [vmem:[%s244 + $0x1a0] sm:$0xff]
        %v371 = vld [vmem:[%s244 + $0x1a8] sm:$0xff]
        %v372 = vld [vmem:[%s244 + $0x1b0] sm:$0xff]
        %v373 = vld [vmem:[%s244 + $0x1b8] sm:$0xff]
        %v374 = vld [vmem:[%s244 + $0x1c0] sm:$0xff]
        %v375 = vld [vmem:[%s244 + $0x1c8] sm:$0xff]
        %v376 = vld [vmem:[%s244 + $0x1d0] sm:$0xff]
        %v377 = vld [vmem:[%s244 + $0x1d8] sm:$0xff]
        %v378 = vld [vmem:[%s244 + $0x1e0] sm:$0xff]
        %v379 = vld [vmem:[%s244 + $0x1e8] sm:$0xff]
        %v380 = vld [vmem:[%s244 + $0x1f0] sm:$0xff]
        %v381 = vld [vmem:[%s244 + $0x1f8] sm:$0xff]
        %382 = vmatpush.msra.mxu0 %v348
        %383 = vmatpush.msra.mxu0 %v346
        %384 = vmatpush.msra.mxu0 %v344
        %385 = vmatpush.msra.mxu0 %v342
        %386 = vmatpush.msra.mxu0 %v340
        %387 = vmatpush.msra.mxu0 %v338
        %388 = vmatpush.msra.mxu0 %v336
        %389 = vmatpush.msra.mxu0 %v334
        %390 = vmatpush.msra.mxu0 %v332
        %391 = vmatpush.msra.mxu0 %v330
        %392 = vmatpush.msra.mxu0 %v328
        %393 = vmatpush.msra.mxu0 %v326
        %394 = vmatpush.msra.mxu0 %v324
        %395 = vmatpush.msra.mxu0 %v322
        %396 = vmatpush.msra.mxu0 %v320
        %397 = vmatpush.msra.mxu0 %v318
        %398 = vmatmul.f32.gmra.mxu0 %v310
        %v399 = vpop.f32.mrf.mxu0
        %v400 = vadd.f32 0.0, %v399
        %401 = vmatmul.f32.gmra.mxu0 %v312
        %v402 = vpop.f32.mrf.mxu0
        %v403 = vadd.f32 0.0, %v402
        %404 = vmatmul.f32.gmra.mxu0 %v314
        %v405 = vpop.f32.mrf.mxu0
        %v406 = vadd.f32 0.0, %v405
        %407 = vmatmul.f32.gmra.mxu0 %v316
        %v408 = vpop.f32.mrf.mxu0
        %v409 = vadd.f32 0.0, %v408
        %410 = vdwg.mxu0
        %411 = vmatpush.msra.mxu0 %v380
        %412 = vmatpush.msra.mxu0 %v378
        %413 = vmatpush.msra.mxu0 %v376
        %414 = vmatpush.msra.mxu0 %v374
        %415 = vmatpush.msra.mxu0 %v372
        %416 = vmatpush.msra.mxu0 %v370
        %417 = vmatpush.msra.mxu0 %v368
        %418 = vmatpush.msra.mxu0 %v366
        %419 = vmatpush.msra.mxu0 %v364
        %420 = vmatpush.msra.mxu0 %v362
        %421 = vmatpush.msra.mxu0 %v360
        %422 = vmatpush.msra.mxu0 %v358
        %423 = vmatpush.msra.mxu0 %v356
        %424 = vmatpush.msra.mxu0 %v354
        %425 = vmatpush.msra.mxu0 %v352
        %426 = vmatpush.msra.mxu0 %v350
        %427 = vmatmul.f32.gmra.mxu0 %v311
        %v428 = vpop.f32.mrf.mxu0
        %v429 = vadd.f32 %v400, %v428
        %430 = vmatmul.f32.gmra.mxu0 %v313
        %v431 = vpop.f32.mrf.mxu0
        %v432 = vadd.f32 %v403, %v431
        %433 = vmatmul.f32.gmra.mxu0 %v315
        %v434 = vpop.f32.mrf.mxu0
        %v435 = vadd.f32 %v406, %v434
        %436 = vmatmul.f32.gmra.mxu0 %v317
        %v437 = vpop.f32.mrf.mxu0
        %v438 = vadd.f32 %v409, %v437
        %439 = vdwg.mxu0
        %440 = vmatpush.msra.mxu0 %v349
        %441 = vmatpush.msra.mxu0 %v347
        %442 = vmatpush.msra.mxu0 %v345
        %443 = vmatpush.msra.mxu0 %v343
        %444 = vmatpush.msra.mxu0 %v341
        %445 = vmatpush.msra.mxu0 %v339
        %446 = vmatpush.msra.mxu0 %v337
        %447 = vmatpush.msra.mxu0 %v335
        %448 = vmatpush.msra.mxu0 %v333
        %449 = vmatpush.msra.mxu0 %v331
        %450 = vmatpush.msra.mxu0 %v329
        %451 = vmatpush.msra.mxu0 %v327
        %452 = vmatpush.msra.mxu0 %v325
        %453 = vmatpush.msra.mxu0 %v323
        %454 = vmatpush.msra.mxu0 %v321
        %455 = vmatpush.msra.mxu0 %v319
        %456 = vmatmul.f32.gmra.mxu0 %v310
        %v457 = vpop.f32.mrf.mxu0
        %v458 = vadd.f32 0.0, %v457
        %459 = vmatmul.f32.gmra.mxu0 %v312
        %v460 = vpop.f32.mrf.mxu0
        %v461 = vadd.f32 0.0, %v460
        %462 = vmatmul.f32.gmra.mxu0 %v314
        %v463 = vpop.f32.mrf.mxu0
        %v464 = vadd.f32 0.0, %v463
        %465 = vmatmul.f32.gmra.mxu0 %v316
        %v466 = vpop.f32.mrf.mxu0
        %v467 = vadd.f32 0.0, %v466
        %468 = vdwg.mxu0
        %469 = vmatpush.msra.mxu0 %v381
        %470 = vmatpush.msra.mxu0 %v379
        %471 = vmatpush.msra.mxu0 %v377
        %472 = vmatpush.msra.mxu0 %v375
        %473 = vmatpush.msra.mxu0 %v373
        %474 = vmatpush.msra.mxu0 %v371
        %475 = vmatpush.msra.mxu0 %v369
        %476 = vmatpush.msra.mxu0 %v367
        %477 = vmatpush.msra.mxu0 %v365
        %478 = vmatpush.msra.mxu0 %v363
        %479 = vmatpush.msra.mxu0 %v361
        %480 = vmatpush.msra.mxu0 %v359
        %481 = vmatpush.msra.mxu0 %v357
        %482 = vmatpush.msra.mxu0 %v355
        %483 = vmatpush.msra.mxu0 %v353
        %484 = vmatpush.msra.mxu0 %v351
        %485 = vmatmul.f32.gmra.mxu0 %v311
        %v486 = vpop.f32.mrf.mxu0
        %v487 = vadd.f32 %v458, %v486
        %488 = vmatmul.f32.gmra.mxu0 %v313
        %v489 = vpop.f32.mrf.mxu0
        %v490 = vadd.f32 %v461, %v489
        %491 = vmatmul.f32.gmra.mxu0 %v315
        %v492 = vpop.f32.mrf.mxu0
        %v493 = vadd.f32 %v464, %v492
        %494 = vmatmul.f32.gmra.mxu0 %v317
        %v495 = vpop.f32.mrf.mxu0
        %v496 = vadd.f32 %v467, %v495
        %497 = vdwg.mxu0
        %v498 = vadd.f32 %v302, %v429
        %v499 = vadd.f32 %v303, %v487
        %v500 = vadd.f32 %v304, %v432
        %v501 = vadd.f32 %v305, %v490
        %v502 = vadd.f32 %v306, %v435
        %v503 = vadd.f32 %v307, %v493
        %v504 = vadd.f32 %v308, %v438
        %v505 = vadd.f32 %v309, %v496
        %506 = vst [vmem:[#allocation2] sm:$0xff] %v498
        %507 = vst [vmem:[#allocation2 + $0x8] sm:$0xff] %v499
        %508 = vst [vmem:[#allocation2 + $0x10] sm:$0xff] %v500
        %509 = vst [vmem:[#allocation2 + $0x18] sm:$0xff] %v501
        %510 = vst [vmem:[#allocation2 + $0x20] sm:$0xff] %v502
        %511 = vst [vmem:[#allocation2 + $0x28] sm:$0xff] %v503
        %512 = vst [vmem:[#allocation2 + $0x30] sm:$0xff] %v504
        %513 = vst [vmem:[#allocation2 + $0x38] sm:$0xff] %v505
        // Predicated region
        $region49: #{tpu_custom_call.1} parent=31 // pred_check
          %p514 = pneg %p290
        $region50: #{tpu_custom_call.1} parent=31 // pred_check_branch
          %516 = sbr.rel (%p514) target = $region52
        $region51: #{tpu_custom_call.1} parent=31 // pred_region
          %v517 = vld [vmem:[#allocation2] sm:$0xff]
          %v518 = vld [vmem:[#allocation2 + $0x8] sm:$0xff]
          %v519 = vld [vmem:[#allocation2 + $0x10] sm:$0xff]
          %v520 = vld [vmem:[#allocation2 + $0x18] sm:$0xff]
          %v521 = vld [vmem:[#allocation2 + $0x20] sm:$0xff]
          %v522 = vld [vmem:[#allocation2 + $0x28] sm:$0xff]
          %v523 = vld [vmem:[#allocation2 + $0x30] sm:$0xff]
          %v524 = vld [vmem:[#allocation2 + $0x38] sm:$0xff]
          %v525 = vld [vmem:[%s254] sm:$0x3]
          %v527 = vperm.slane %v525, 0
          %v528 = vperm.slane %v525, 1
          %v531 = vadd.f32 %v517, %v527
          %v532 = vadd.f32 %v518, %v528
          %v533 = vadd.f32 %v519, %v527
          %v534 = vadd.f32 %v520, %v528
          %v535 = vadd.f32 %v521, %v527
          %v536 = vadd.f32 %v522, %v528
          %v537 = vadd.f32 %v523, %v527
          %v538 = vadd.f32 %v524, %v528
          %539 = vst [vmem:[%s282] sm:$0xff] %v531
          %540 = vst [vmem:[%s282 + $0x8] sm:$0xff] %v532
          %541 = vst [vmem:[%s282 + $0x10] sm:$0xff] %v533
          %542 = vst [vmem:[%s282 + $0x18] sm:$0xff] %v534
          %543 = vst [vmem:[%s282 + $0x20] sm:$0xff] %v535
          %544 = vst [vmem:[%s282 + $0x28] sm:$0xff] %v536
          %545 = vst [vmem:[%s282 + $0x30] sm:$0xff] %v537
          %546 = vst [vmem:[%s282 + $0x38] sm:$0xff] %v538
        $region52: #{tpu_custom_call.1} parent=31 // pred_fallthru
          _
        %s547 = sand.u32 %s132, 1
        %s548 = scalar_lea.sflag [#allocation5], %s547
        %s549 = sand.u32 %s132, 1
        %s550 = smul.addr %s549, 64
        %s551 = scalar_lea.vmem [#allocation9], %s550
        // Predicated region
        $region53: #{tpu_custom_call.1} parent=31 // pred_check
          %p552 = pneg %p142
        $region54: #{tpu_custom_call.1} parent=31 // pred_check_branch
          %554 = sbr.rel (%p552) target = $region56
        $region55: #{tpu_custom_call.1} parent=31 // pred_region
          %s555 = smul.u32 4, %s26
          %s556 = smul.u32 2, %s27
          %558 = vsyncadd %s548, 0
          %s559 = smul.addr %s555, 6
          %s560 = sadd.s32 %s556, %s559
          %s561 = smul.addr %s560, 8
          %s562 = scalar_lea.hbm %s3, %s561
          %s563 = sshll.u32 %s551, 4
          %s564 = int_to_ptr.vmem [resolvable:$true] %s563
          %s565 = sshll.u32 %s562, 4
          %s566 = int_to_ptr.hbm [resolvable:$true] %s565
          %571 = dma.vmem_to_hbm [thread:$0]  %s564, 1024, %s566, %s548, 256, 768, 16
        $region56: #{tpu_custom_call.1} parent=31 // pred_fallthru
          _
      $region32: #{tpu_custom_call.1} parent=5 // pred_fallthru
        _
      %p572 = scmp.le.s32.totalorder 2, %s16
      // Predicated region
      $region57: #{tpu_custom_call.1} parent=5 // pred_check
        %p573 = pneg %p572
      $region58: #{tpu_custom_call.1} parent=5 // pred_check_branch
        %575 = sbr.rel (%p573) target = $region60
      $region59: #{tpu_custom_call.1} parent=5 // pred_region
        %s576 = ssub.s32 %s16, 2
        // Predicated region
        $region61: #{tpu_custom_call.1} parent=59 // pred_check
          %p577 = pneg %p148
        $region62: #{tpu_custom_call.1} parent=59 // pred_check_branch
          %579 = sbr.rel (%p577) target = $region64
        $region63: #{tpu_custom_call.1} parent=59 // pred_region
          %s580 = sand.u32 %s133, 1
          %s581 = scalar_lea.sflag [#allocation5], %s580
          %s582 = sand.u32 %s133, 1
          %s583 = smul.addr %s582, 64
          %s584 = scalar_lea.vmem [#allocation9], %s583
          %586 = dma.done %s581, 1024
        $region64: #{tpu_custom_call.1} parent=59 // pred_fallthru
          _
      $region60: #{tpu_custom_call.1} parent=5 // pred_fallthru
        _
    $region6: #{tpu_custom_call.1} parent=1 // loop_footer
      %s20 = sadd.s32 1, %s16
    $region7: #{tpu_custom_call.1} parent=1 // loop_footer_branch
      %15 = sbr.rel target = $region3
    $region8: #{tpu_custom_call.1} parent=1 // loop_exit
      _
    %587 = vsyncpa [#allocation4], 1
    %s588 = scalar_lea.sflag [#allocation4], 1
    %589 = vsyncpa %s588, 1
    %590 = vsyncpa [#allocation7], 1
    %s591 = scalar_lea.sflag [#allocation7], 1
    %592 = vsyncpa %s591, 1
    %593 = vsyncpa [#allocation5], 1
    %s594 = scalar_lea.sflag [#allocation5], 1
    %595 = vsyncpa %s594, 1

</llo_original>
